<compile_context>
chip_gen: v7x
topology: tpu7x:2x2x1
jax: 0.10.0
libtpu: 0.0.40
codegen_flags: <defaults>
</compile_context>

<pallas_src>
import functools

import jax
import jax.numpy as jnp
from jax import lax
from jax.experimental import pallas as pl
from jax.experimental.pallas import tpu as pltpu


# ----------------------------- Pallas kernel ------------------------------ #
def _dbdp_mlp_kernel(x_ref, w1_ref, b1_ref, w23_ref, b23_ref, w4_ref, b4_ref,
                     yzu_ref):
    # Standardization and the time column are pre-folded into w1/b1, so the
    # body is a pure 4-dot MLP on the raw x tile.
    h = jnp.tanh(jnp.dot(x_ref[...], w1_ref[...],
                         preferred_element_type=jnp.float32) + b1_ref[...])
    h = jnp.tanh(jnp.dot(h, w23_ref[0],
                         preferred_element_type=jnp.float32) + b23_ref[0:1, :])
    h = jnp.tanh(jnp.dot(h, w23_ref[1],
                         preferred_element_type=jnp.float32) + b23_ref[1:2, :])
    # Single contiguous output store (y/z/u split happens in the wrapper).
    yzu_ref[...] = jnp.dot(h, w4_ref[...],
                           preferred_element_type=jnp.float32) + b4_ref[...]


# ------------------------- parameter preparation --------------------------- #
def prepare_params(params, dim_x):
    """One-time re-layout of the torch-style parameters (outside the sweep)."""
    w1 = params["w1"]                                       # (dim_x+1, dim_h)
    return {
        "w1x": w1[:dim_x],                                  # (dim_x, dim_h)
        "w1t": w1[dim_x:dim_x + 1],                         # (1, dim_h) time row
        "b1": params["b1"],                                 # (1, dim_h)
        "w23": jnp.stack([params["w2"], params["w3"]]),     # (2, dim_h, dim_h)
        "b23": jnp.concatenate([params["b2"], params["b3"]], axis=0),  # (2, dim_h)
        "w4": params["w4"],                                 # (dim_h, out_dim)
        "b4": params["b4"],                                 # (1, out_dim)
    }


def _choose_tile_b(B, max_tile_b):
    """Batch-tile size: as big as possible, multiple of 8 when tiled, and
    split in two for large batches so v7x's two TensorCores both get work."""
    if B > max_tile_b:
        return max_tile_b                       # multiple of 8 by construction
    if B >= 2048 and B % 16 == 0:
        return B // 2                           # >= 2 grid steps for megacore
    return B                                    # single full-extent tile


# ------------------------------- wrapper ----------------------------------- #
def model_forward(prepped, N, n, x, *, T, dim_x, dim_y, dim_d, dim_j,
                  max_tile_b=4096):
    """Mirrors Model.forward(N, n, x) -> (y, z, u).

    `N` and `n` may be traced scalars: one compilation serves every time step
    of the DBDP sweep (standardize-or-not is a runtime select).
    """
    x = x.astype(jnp.float32)
    B = x.shape[0]
    dim_h = prepped["w1x"].shape[1]
    dim_yd = dim_y * dim_d
    dim_dj = dim_d * dim_j
    out_dim = dim_y + dim_yd + dim_dj

    n_f = jnp.asarray(n, jnp.float32)
    t_val = (T / jnp.asarray(N, jnp.float32)) * n_f
    standardize = n_f != 0.0

    # Full-batch standardization stats (torch.std: unbiased, ddof=1).  When
    # n == 0 the stats degenerate to the identity transform.  NOTE: ddof=1 is
    # NaN for B == 1, matching torch's behavior.
    mean = jnp.where(standardize, jnp.mean(x, axis=0), 0.0)            # (dim_x,)
    inv_sd = jnp.where(standardize,
                       lax.rsqrt(jnp.var(x, axis=0, ddof=1)), 1.0)      # (dim_x,)

    # Fold standardization + the (batch-constant) time column into layer 1:
    #   ((x - mean) * inv_sd) @ W1x + t*W1t + b1
    #     == x @ (inv_sd[:,None] * W1x) + (t*W1t + b1 - (mean*inv_sd) @ W1x)
    w1_eff = inv_sd[:, None] * prepped["w1x"]                           # (dim_x, dim_h)
    b1_eff = (t_val * prepped["w1t"] + prepped["b1"]
              - (mean * inv_sd)[None, :] @ prepped["w1x"])              # (1, dim_h)

    tile_b = _choose_tile_b(B, max_tile_b)
    grid = (pl.cdiv(B, tile_b),)

    full2d = lambda shape: pl.BlockSpec(shape, lambda i: (0, 0))

    yzu = pl.pallas_call(
        _dbdp_mlp_kernel,
        out_shape=jax.ShapeDtypeStruct((B, out_dim), jnp.float32),
        grid=grid,
        in_specs=[
            pl.BlockSpec((tile_b, dim_x), lambda i: (i, 0)),          # x tile
            full2d((dim_x, dim_h)),                                   # w1_eff
            full2d((1, dim_h)),                                       # b1_eff
            pl.BlockSpec((2, dim_h, dim_h), lambda i: (0, 0, 0)),     # w2/w3
            full2d((2, dim_h)),                                       # b2/b3
            full2d((dim_h, out_dim)),                                 # w4
            full2d((1, out_dim)),                                     # b4
        ],
        out_specs=pl.BlockSpec((tile_b, out_dim), lambda i: (i, 0)),
        compiler_params=pltpu.CompilerParams(
            dimension_semantics=("parallel",)),
    )(x, w1_eff, b1_eff, prepped["w23"], prepped["b23"],
      prepped["w4"], prepped["b4"])

    # Head split + reshapes in XLA (cheap views; keeps the kernel store dense).
    y = yzu[:, :dim_y]
    z = yzu[:, dim_y:dim_y + dim_yd].reshape(-1, dim_y, dim_d)
    u = yzu[:, dim_y + dim_yd:].reshape(-1, dim_y)
    return y, z, u


# --------------------------- pure-JAX reference ---------------------------- #
def _reference_forward(params, N, n, x, *, T, dim_x, dim_y, dim_d, dim_j):
    delta_t = T / N
    if n != 0:
        mean = jnp.mean(x, axis=0)
        sd = jnp.std(x, axis=0, ddof=1)       # torch.std is unbiased
        x_nor = (x - mean) / sd
    else:
        x_nor = x
    inpt = jnp.concatenate(
        [x_nor, jnp.full((x.shape[0], 1), delta_t * n, dtype=x.dtype)], axis=1)
    h = jnp.tanh(inpt @ params["w1"] + params["b1"])
    h = jnp.tanh(h @ params["w2"] + params["b2"])
    h = jnp.tanh(h @ params["w3"] + params["b3"])
    yzu = h @ params["w4"] + params["b4"]
    y = yzu[:, :dim_y]
    z = yzu[:, dim_y:dim_y + dim_y * dim_d].reshape(-1, dim_y, dim_d)
    u = yzu[:, dim_y + dim_y * dim_d:].reshape(-1, dim_y)
    return y, z, u


# --------------------------------- main ------------------------------------ #
if __name__ == "__main__":
    # Synthetic "equation" configuration (small shapes).
    dim_x, dim_y, dim_d, dim_j = 4, 4, 4, 4    # dim_d*dim_j divisible by dim_y
    dim_h = 32
    T = 1.0
    N_steps = 10

    out_dim = dim_y + dim_y * dim_d + dim_d * dim_j

    key = jax.random.PRNGKey(0)
    k = jax.random.split(key, 9)
    raw_params = {
        "w1": 0.2 * jax.random.normal(k[0], (dim_x + 1, dim_h), jnp.float32),
        "b1": 0.1 * jax.random.normal(k[1], (1, dim_h), jnp.float32),
        "w2": 0.2 * jax.random.normal(k[2], (dim_h, dim_h), jnp.float32),
        "b2": 0.1 * jax.random.normal(k[3], (1, dim_h), jnp.float32),
        "w3": 0.2 * jax.random.normal(k[4], (dim_h, dim_h), jnp.float32),
        "b3": 0.1 * jax.random.normal(k[5], (1, dim_h), jnp.float32),
        "w4": 0.2 * jax.random.normal(k[6], (dim_h, out_dim), jnp.float32),
        "b4": 0.1 * jax.random.normal(k[7], (1, out_dim), jnp.float32),
    }

    prepped = prepare_params(raw_params, dim_x)

    common = dict(T=T, dim_x=dim_x, dim_y=dim_y, dim_d=dim_d, dim_j=dim_j)
    # Single-tile path (small batch) and multi-tile path (partial last tile).
    fwd_small = jax.jit(functools.partial(model_forward, **common))
    fwd_tiled = jax.jit(functools.partial(model_forward, max_tile_b=256, **common))

    test_cases = [
        (8, fwd_small),     # B=8: one full-extent tile, grid=(1,)
        (640, fwd_tiled),   # B=640, tile_b=256: grid=(3,), partial last tile
    ]

    for B, fwd in test_cases:
        x = jax.random.normal(jax.random.fold_in(k[8], B), (B, dim_x), jnp.float32)
        for n_step in (2, 0):   # standardized path and n == 0 path, same executable
            y, z, u = fwd(prepped, N_steps, n_step, x)
            jax.block_until_ready((y, z, u))

            y_r, z_r, u_r = _reference_forward(
                raw_params, N_steps, n_step, x, **common)

            assert y.shape == (B, dim_y) and z.shape == (B, dim_y, dim_d)
            assert u.shape == (B * dim_d * dim_j // dim_y, dim_y)
            assert jnp.allclose(y, y_r, atol=1e-5, rtol=1e-5)
            assert jnp.allclose(z, z_r, atol=1e-5, rtol=1e-5)
            assert jnp.allclose(u, u_r, atol=1e-5, rtol=1e-5)

    print("KERNEL_OK")
</pallas_src>

<mosaic_0001>
module attributes {stable_mosaic.version = 11 : i64} {
  func.func @_dbdp_mlp_kernel(%arg0: i32, %arg1: memref<8x4xf32, #tpu.memory_space<vmem>>, %arg2: memref<4x32xf32, #tpu.memory_space<vmem>>, %arg3: memref<1x32xf32, #tpu.memory_space<vmem>>, %arg4: memref<2x32x32xf32, #tpu.memory_space<vmem>>, %arg5: memref<2x32xf32, #tpu.memory_space<vmem>>, %arg6: memref<32x36xf32, #tpu.memory_space<vmem>>, %arg7: memref<1x36xf32, #tpu.memory_space<vmem>>, %arg8: memref<8x36xf32, #tpu.memory_space<vmem>>) attributes {dimension_semantics = [#tpu.dimension_semantics<parallel>], iteration_bounds = array<i64: 1>, scalar_prefetch = 0 : i64, scratch_operands = 0 : i64, tpu.core_type = #tpu.core_type<tc>, window_params = [{transform_indices = @transform_0, window_bounds = array<i64: 8, 4>}, {pipeline_mode = #tpu.pipeline_mode<synchronous>, transform_indices = @transform_1, window_bounds = array<i64: 4, 32>}, {pipeline_mode = #tpu.pipeline_mode<synchronous>, transform_indices = @transform_2, window_bounds = array<i64: 1, 32>}, {pipeline_mode = #tpu.pipeline_mode<synchronous>, transform_indices = @transform_3, window_bounds = array<i64: 2, 32, 32>}, {pipeline_mode = #tpu.pipeline_mode<synchronous>, transform_indices = @transform_4, window_bounds = array<i64: 2, 32>}, {pipeline_mode = #tpu.pipeline_mode<synchronous>, transform_indices = @transform_5, window_bounds = array<i64: 32, 36>}, {pipeline_mode = #tpu.pipeline_mode<synchronous>, transform_indices = @transform_6, window_bounds = array<i64: 1, 36>}, {transform_indices = @transform_7, window_bounds = array<i64: 8, 36>}]} {
    %c0 = arith.constant 0 : index
    %c0_0 = arith.constant 0 : index
    %0 = vector.load %arg1[%c0, %c0_0] : memref<8x4xf32, #tpu.memory_space<vmem>>, vector<8x4xf32>
    %c0_1 = arith.constant 0 : index
    %c0_2 = arith.constant 0 : index
    %1 = vector.load %arg2[%c0_1, %c0_2] : memref<4x32xf32, #tpu.memory_space<vmem>>, vector<4x32xf32>
    %cst = arith.constant dense<0.000000e+00> : vector<8x32xf32>
    %2 = tpu.matmul %0, %1, %cst {dimension_numbers = #tpu.dot_dimension_numbers<[1], [0], [0], [1], [0, 0, 1, 1], [], []>} : vector<8x4xf32>, vector<4x32xf32>, vector<8x32xf32> -> vector<8x32xf32>
    %c0_3 = arith.constant 0 : index
    %c0_4 = arith.constant 0 : index
    %3 = vector.load %arg3[%c0_3, %c0_4] : memref<1x32xf32, #tpu.memory_space<vmem>>, vector<1x32xf32>
    %4 = vector.broadcast %3 : vector<1x32xf32> to vector<8x32xf32>
    %5 = arith.addf %2, %4 : vector<8x32xf32>
    %6 = math.tanh %5 : vector<8x32xf32>
    %c0_5 = arith.constant 0 : index
    %c0_6 = arith.constant 0 : index
    %c0_7 = arith.constant 0 : index
    %7 = vector.load %arg4[%c0_5, %c0_6, %c0_7] : memref<2x32x32xf32, #tpu.memory_space<vmem>>, vector<1x32x32xf32>
    %8 = vector.shape_cast %7 : vector<1x32x32xf32> to vector<32x32xf32>
    %cst_8 = arith.constant dense<0.000000e+00> : vector<8x32xf32>
    %9 = tpu.matmul %6, %8, %cst_8 {dimension_numbers = #tpu.dot_dimension_numbers<[1], [0], [0], [1], [0, 0, 1, 1], [], []>} : vector<8x32xf32>, vector<32x32xf32>, vector<8x32xf32> -> vector<8x32xf32>
    %c0_9 = arith.constant 0 : index
    %c0_10 = arith.constant 0 : index
    %10 = vector.load %arg5[%c0_9, %c0_10] : memref<2x32xf32, #tpu.memory_space<vmem>>, vector<1x32xf32>
    %11 = vector.broadcast %10 : vector<1x32xf32> to vector<8x32xf32>
    %12 = arith.addf %9, %11 : vector<8x32xf32>
    %13 = math.tanh %12 : vector<8x32xf32>
    %c1 = arith.constant 1 : index
    %c0_11 = arith.constant 0 : index
    %c0_12 = arith.constant 0 : index
    %14 = vector.load %arg4[%c1, %c0_11, %c0_12] : memref<2x32x32xf32, #tpu.memory_space<vmem>>, vector<1x32x32xf32>
    %15 = vector.shape_cast %14 : vector<1x32x32xf32> to vector<32x32xf32>
    %cst_13 = arith.constant dense<0.000000e+00> : vector<8x32xf32>
    %16 = tpu.matmul %13, %15, %cst_13 {dimension_numbers = #tpu.dot_dimension_numbers<[1], [0], [0], [1], [0, 0, 1, 1], [], []>} : vector<8x32xf32>, vector<32x32xf32>, vector<8x32xf32> -> vector<8x32xf32>
    %c1_14 = arith.constant 1 : index
    %c0_15 = arith.constant 0 : index
    %17 = vector.load %arg5[%c1_14, %c0_15] : memref<2x32xf32, #tpu.memory_space<vmem>>, vector<1x32xf32>
    %18 = vector.broadcast %17 : vector<1x32xf32> to vector<8x32xf32>
    %19 = arith.addf %16, %18 : vector<8x32xf32>
    %20 = math.tanh %19 : vector<8x32xf32>
    %c0_16 = arith.constant 0 : index
    %c0_17 = arith.constant 0 : index
    %21 = vector.load %arg6[%c0_16, %c0_17] : memref<32x36xf32, #tpu.memory_space<vmem>>, vector<32x36xf32>
    %cst_18 = arith.constant dense<0.000000e+00> : vector<8x36xf32>
    %22 = tpu.matmul %20, %21, %cst_18 {dimension_numbers = #tpu.dot_dimension_numbers<[1], [0], [0], [1], [0, 0, 1, 1], [], []>} : vector<8x32xf32>, vector<32x36xf32>, vector<8x36xf32> -> vector<8x36xf32>
    %c0_19 = arith.constant 0 : index
    %c0_20 = arith.constant 0 : index
    %23 = vector.load %arg7[%c0_19, %c0_20] : memref<1x36xf32, #tpu.memory_space<vmem>>, vector<1x36xf32>
    %24 = vector.broadcast %23 : vector<1x36xf32> to vector<8x36xf32>
    %25 = arith.addf %22, %24 : vector<8x36xf32>
    %c0_21 = arith.constant 0 : index
    %c0_22 = arith.constant 0 : index
    %26 = vector.load %arg8[%c0_21, %c0_22] : memref<8x36xf32, #tpu.memory_space<vmem>>, vector<8x36xf32>
    tpu.vector_store %arg8[%c0_21, %c0_22], %25 {strides = array<i32>} : memref<8x36xf32, #tpu.memory_space<vmem>>, vector<8x36xf32>,
    return
  }
  func.func @transform_0(%arg0: i32) -> (i32, i32) {
    %c0_i32 = arith.constant 0 : i32
    %c0_i32_0 = arith.constant 0 : i32
    return %arg0, %c0_i32 : i32, i32
  }
  func.func @transform_1(%arg0: i32) -> (i32, i32) {
    %c0_i32 = arith.constant 0 : i32
    %c0_i32_0 = arith.constant 0 : i32
    %c0_i32_1 = arith.constant 0 : i32
    return %c0_i32, %c0_i32_0 : i32, i32
  }
  func.func @transform_2(%arg0: i32) -> (i32, i32) {
    %c0_i32 = arith.constant 0 : i32
    %c0_i32_0 = arith.constant 0 : i32
    %c0_i32_1 = arith.constant 0 : i32
    return %c0_i32, %c0_i32_0 : i32, i32
  }
  func.func @transform_3(%arg0: i32) -> (i32, i32, i32) {
    %c0_i32 = arith.constant 0 : i32
    %c0_i32_0 = arith.constant 0 : i32
    %c0_i32_1 = arith.constant 0 : i32
    %c0_i32_2 = arith.constant 0 : i32
    return %c0_i32, %c0_i32_0, %c0_i32_1 : i32, i32, i32
  }
  func.func @transform_4(%arg0: i32) -> (i32, i32) {
    %c0_i32 = arith.constant 0 : i32
    %c0_i32_0 = arith.constant 0 : i32
    %c0_i32_1 = arith.constant 0 : i32
    return %c0_i32, %c0_i32_0 : i32, i32
  }
  func.func @transform_5(%arg0: i32) -> (i32, i32) {
    %c0_i32 = arith.constant 0 : i32
    %c0_i32_0 = arith.constant 0 : i32
    %c0_i32_1 = arith.constant 0 : i32
    return %c0_i32, %c0_i32_0 : i32, i32
  }
  func.func @transform_6(%arg0: i32) -> (i32, i32) {
    %c0_i32 = arith.constant 0 : i32
    %c0_i32_0 = arith.constant 0 : i32
    %c0_i32_1 = arith.constant 0 : i32
    return %c0_i32, %c0_i32_0 : i32, i32
  }
  func.func @transform_7(%arg0: i32) -> (i32, i32) {
    %c0_i32 = arith.constant 0 : i32
    %c0_i32_0 = arith.constant 0 : i32
    return %arg0, %c0_i32 : i32, i32
  }
}

</mosaic_0001>

<llo_original>
// kernel: model_forward.1
$region0: #{model_forward.1}
  #allocation0 [shape = 'u32[]', space=smem, size = 0x4, offset = 0x4, fixed_abs, tag = 'smem constant byte address 0x4 - core index']
  #allocation1 [shape = 'u32[144,128]{1,0:T(1,128)}', space=vmem, size = 0x12000, scoped, tag = 'internal scratch']
  %s0 = inlined_call_operand.vmem [shape: f32[8,4], index: 0, kind: input, shape index: {}]
  %s1 = inlined_call_operand.vmem [shape: f32[4,32], index: 1, kind: input, shape index: {}]
  %s2 = inlined_call_operand.vmem [shape: f32[1,32], index: 2, kind: input, shape index: {}]
  %s3 = inlined_call_operand.vmem [shape: f32[2,32,32], index: 3, kind: input, shape index: {}]
  %s4 = inlined_call_operand.vmem [shape: f32[2,32], index: 4, kind: input, shape index: {}]
  %s5 = inlined_call_operand.hbm [shape: f32[32,36], index: 5, kind: input, shape index: {}]
  %s6 = inlined_call_operand.vmem [shape: f32[1,36], index: 6, kind: input, shape index: {}]
  %s7 = inlined_call_operand.vmem [shape: f32[8,36], index: 7, kind: output, shape index: {}]
  %s8 = sld [smem:[#allocation0]]
  $region42: #{model_forward.1} parent=0
    _
  %s10 = ssub.s32 1, %s8
  %s11 = scalar_select 0, %s10, %s8
  $region1: #{model_forward.1} parent=0
    #allocation2 [shape = 'u8[16384]{0}', space=vmem, size = 0x4000, scoped, tag = 'input window, operand 5, single buffered']
    #allocation3 [shape = 's32[1]{0}', space=sflag, size = 0x4, scoped, tag = 'scoped memory for model_forward.1']
    %12 = vsyncpa [#allocation3], 0
    // Predicated region
    $region2: #{model_forward.1} parent=1 // pred_check
      _
    $region3: #{model_forward.1} parent=1 // pred_check_branch
      %14 = sbr.rel (0) target = $region5
    $region4: #{model_forward.1} parent=1 // pred_region
      _
    $region5: #{model_forward.1} parent=1 // pred_fallthru
      _
    // Predicated region
    $region6: #{model_forward.1} parent=1 // pred_check
      _
    $region7: #{model_forward.1} parent=1 // pred_check_branch
      %16 = sbr.rel (0) target = $region9
    $region8: #{model_forward.1} parent=1 // pred_region
      _
    $region9: #{model_forward.1} parent=1 // pred_fallthru
      _
    // Predicated region
    $region10: #{model_forward.1} parent=1 // pred_check
      _
    $region11: #{model_forward.1} parent=1 // pred_check_branch
      %18 = sbr.rel (0) target = $region13
    $region12: #{model_forward.1} parent=1 // pred_region
      _
    $region13: #{model_forward.1} parent=1 // pred_fallthru
      _
    // Predicated region
    $region14: #{model_forward.1} parent=1 // pred_check
      _
    $region15: #{model_forward.1} parent=1 // pred_check_branch
      %20 = sbr.rel (0) target = $region17
    $region16: #{model_forward.1} parent=1 // pred_region
      _
    $region17: #{model_forward.1} parent=1 // pred_fallthru
      _
    // Predicated region
    $region18: #{model_forward.1} parent=1 // pred_check
      _
    $region19: #{model_forward.1} parent=1 // pred_check_branch
      %22 = sbr.rel (0) target = $region21
    $region20: #{model_forward.1} parent=1 // pred_region
      _
    $region21: #{model_forward.1} parent=1 // pred_fallthru
      _
    // Predicated region
    $region22: #{model_forward.1} parent=1 // pred_check
      _
    $region23: #{model_forward.1} parent=1 // pred_check_branch
      %24 = sbr.rel (0) target = $region25
    $region24: #{model_forward.1} parent=1 // pred_region
      %s26 = ssub.s32 512, 512
      %27 = vsyncadd [#allocation3], %s26
      %s28 = sshll.u32 [#allocation2], 4
      %s29 = int_to_ptr.vmem [resolvable:$true] %s28
      %34 = dma.hbm_to_vmem [thread:$0]  %s5, 512, %s29, [#allocation3], 128, 128, 8
    $region25: #{model_forward.1} parent=1 // pred_fallthru
      _
    // Predicated region
    $region26: #{model_forward.1} parent=1 // pred_check
      _
    $region27: #{model_forward.1} parent=1 // pred_check_branch
      %36 = sbr.rel (0) target = $region29
    $region28: #{model_forward.1} parent=1 // pred_region
      _
    $region29: #{model_forward.1} parent=1 // pred_fallthru
      _
    // Predicated region
    $region30: #{model_forward.1} parent=1 // pred_check
      _
    $region31: #{model_forward.1} parent=1 // pred_check_branch
      %38 = sbr.rel (0) target = $region33
    $region32: #{model_forward.1} parent=1 // pred_region
      %39 = dma.done [#allocation3], 512
    $region33: #{model_forward.1} parent=1 // pred_fallthru
      _
    %v40 = vld [vmem:[%s0] sm:$0xff]
    %v41 = vld [vmem:[%s1] sm:$0xf]
    %v42 = vld [vmem:[%s2] sm:$0x1]
    %v44 = vlaneseq
    %v45 = vshrl.u32 %v44, 7
    %v46 = vsub.s32 0, %v45
    %v47 = vrot.slane %v42, %v46
    %vm49 = vcmask 31744
    %v51 = vsel %vm49, %v40, 0
    %vm53 = vcmask 1043456
    %v55 = vsel %vm53, %v41, 0
    %57 = vmatprep.subr.mxu0 0.0
    %58 = vmatpush1.msra.mxu0 %v55
    %59 = vmatprep.subr.mxu0 0.0
    %60 = vmatpush1.msra.mxu0 0.0
    %61 = vmatprep.subr.mxu0 0.0
    %62 = vmatpush1.msra.mxu0 0.0
    %63 = vmatprep.subr.mxu0 0.0
    %64 = vmatpush1.msra.mxu0 0.0
    %65 = vmatprep.subr.mxu0 0.0
    %66 = vmatpush1.msra.mxu0 0.0
    %67 = vmatprep.subr.mxu0 0.0
    %68 = vmatpush1.msra.mxu0 0.0
    %69 = vmatprep.subr.mxu0 0.0
    %70 = vmatpush1.msra.mxu0 0.0
    %71 = vmatprep.subr.mxu0 0.0
    %72 = vmatpush1.msra.mxu0 0.0
    %73 = vmatprep.subr.mxu0 0.0
    %74 = vmatpush1.msra.mxu0 0.0
    %75 = vmatprep.subr.mxu0 0.0
    %76 = vmatpush1.msra.mxu0 0.0
    %77 = vmatprep.subr.mxu0 0.0
    %78 = vmatpush1.msra.mxu0 0.0
    %79 = vmatprep.subr.mxu0 0.0
    %80 = vmatpush1.msra.mxu0 0.0
    %81 = vmatprep.subr.mxu0 0.0
    %82 = vmatpush1.msra.mxu0 0.0
    %83 = vmatprep.subr.mxu0 0.0
    %84 = vmatpush1.msra.mxu0 0.0
    %85 = vmatprep.subr.mxu0 0.0
    %86 = vmatpush1.msra.mxu0 0.0
    %87 = vmatprep.subr.mxu0 0.0
    %88 = vmatpush1.msra.mxu0 0.0
    %89 = vmatprep.subr.mxu0 0.0
    %90 = vmatpush1.msra.mxu0 0.0
    %91 = vmatprep.subr.mxu0 0.0
    %92 = vmatpush1.msra.mxu0 0.0
    %93 = vmatprep.subr.mxu0 0.0
    %94 = vmatpush1.msra.mxu0 0.0
    %95 = vmatprep.subr.mxu0 0.0
    %96 = vmatpush1.msra.mxu0 0.0
    %97 = vmatprep.subr.mxu0 0.0
    %98 = vmatpush1.msra.mxu0 0.0
    %99 = vmatprep.subr.mxu0 0.0
    %100 = vmatpush1.msra.mxu0 0.0
    %101 = vmatprep.subr.mxu0 0.0
    %102 = vmatpush1.msra.mxu0 0.0
    %103 = vmatprep.subr.mxu0 0.0
    %104 = vmatpush1.msra.mxu0 0.0
    %105 = vmatprep.subr.mxu0 0.0
    %106 = vmatpush1.msra.mxu0 0.0
    %107 = vmatprep.subr.mxu0 0.0
    %108 = vmatpush1.msra.mxu0 0.0
    %109 = vmatprep.subr.mxu0 0.0
    %110 = vmatpush1.msra.mxu0 0.0
    %111 = vmatprep.subr.mxu0 0.0
    %112 = vmatpush1.msra.mxu0 0.0
    %113 = vmatprep.subr.mxu0 0.0
    %114 = vmatpush1.msra.mxu0 0.0
    %115 = vmatprep.subr.mxu0 0.0
    %116 = vmatpush1.msra.mxu0 0.0
    %117 = vmatprep.subr.mxu0 0.0
    %118 = vmatpush1.msra.mxu0 0.0
    %119 = vmatprep.subr.mxu0 0.0
    %120 = vmatpush1.msra.mxu0 0.0
    %121 = vmatprep.mubr.f32.mxu0 0.0
    %122 = vmatmul.mubr.f32.gmra.mrb[0].mxu0 %v51
    %v123 = vpop.f32.mrb[0].mxu0
    %v124 = vadd.f32 %v47, %v123
    %v125 = vpop.f32.mrb[0].mxu0
    %126 = vdwg.mxu0
    %v127 = vtanh.pop %v124
    %v128 = vld [vmem:[%s3] sm:$0xff]
    %v129 = vld [vmem:[%s3 + $0x8] sm:$0xff]
    %v130 = vld [vmem:[%s3 + $0x10] sm:$0xff]
    %v131 = vld [vmem:[%s3 + $0x18] sm:$0xff]
    %v132 = vld [vmem:[%s4] sm:$0x1]
    %v133 = vlaneseq
    %v134 = vshrl.u32 %v133, 7
    %v135 = vsub.s32 0, %v134
    %v136 = vrot.slane %v132, %v135
    %vm137 = vcmask 261120
    %v139 = vsel %vm137, %v127, 0
    %141 = vmatprep.subr.mxu0 0.0
    %142 = vmatpush1.msra.mxu0 %v128
    %143 = vmatprep.subr.mxu0 0.0
    %144 = vmatpush1.msra.mxu0 %v129
    %145 = vmatprep.subr.mxu0 0.0
    %146 = vmatpush1.msra.mxu0 %v130
    %147 = vmatprep.subr.mxu0 0.0
    %148 = vmatpush1.msra.mxu0 %v131
    %149 = vmatprep.subr.mxu0 0.0
    %150 = vmatpush1.msra.mxu0 0.0
    %151 = vmatprep.subr.mxu0 0.0
    %152 = vmatpush1.msra.mxu0 0.0
    %153 = vmatprep.subr.mxu0 0.0
    %154 = vmatpush1.msra.mxu0 0.0
    %155 = vmatprep.subr.mxu0 0.0
    %156 = vmatpush1.msra.mxu0 0.0
    %157 = vmatprep.subr.mxu0 0.0
    %158 = vmatpush1.msra.mxu0 0.0
    %159 = vmatprep.subr.mxu0 0.0
    %160 = vmatpush1.msra.mxu0 0.0
    %161 = vmatprep.subr.mxu0 0.0
    %162 = vmatpush1.msra.mxu0 0.0
    %163 = vmatprep.subr.mxu0 0.0
    %164 = vmatpush1.msra.mxu0 0.0
    %165 = vmatprep.subr.mxu0 0.0
    %166 = vmatpush1.msra.mxu0 0.0
    %167 = vmatprep.subr.mxu0 0.0
    %168 = vmatpush1.msra.mxu0 0.0
    %169 = vmatprep.subr.mxu0 0.0
    %170 = vmatpush1.msra.mxu0 0.0
    %171 = vmatprep.subr.mxu0 0.0
    %172 = vmatpush1.msra.mxu0 0.0
    %173 = vmatprep.subr.mxu0 0.0
    %174 = vmatpush1.msra.mxu0 0.0
    %175 = vmatprep.subr.mxu0 0.0
    %176 = vmatpush1.msra.mxu0 0.0
    %177 = vmatprep.subr.mxu0 0.0
    %178 = vmatpush1.msra.mxu0 0.0
    %179 = vmatprep.subr.mxu0 0.0
    %180 = vmatpush1.msra.mxu0 0.0
    %181 = vmatprep.subr.mxu0 0.0
    %182 = vmatpush1.msra.mxu0 0.0
    %183 = vmatprep.subr.mxu0 0.0
    %184 = vmatpush1.msra.mxu0 0.0
    %185 = vmatprep.subr.mxu0 0.0
    %186 = vmatpush1.msra.mxu0 0.0
    %187 = vmatprep.subr.mxu0 0.0
    %188 = vmatpush1.msra.mxu0 0.0
    %189 = vmatprep.subr.mxu0 0.0
    %190 = vmatpush1.msra.mxu0 0.0
    %191 = vmatprep.subr.mxu0 0.0
    %192 = vmatpush1.msra.mxu0 0.0
    %193 = vmatprep.subr.mxu0 0.0
    %194 = vmatpush1.msra.mxu0 0.0
    %195 = vmatprep.subr.mxu0 0.0
    %196 = vmatpush1.msra.mxu0 0.0
    %197 = vmatprep.subr.mxu0 0.0
    %198 = vmatpush1.msra.mxu0 0.0
    %199 = vmatprep.subr.mxu0 0.0
    %200 = vmatpush1.msra.mxu0 0.0
    %201 = vmatprep.subr.mxu0 0.0
    %202 = vmatpush1.msra.mxu0 0.0
    %203 = vmatprep.subr.mxu0 0.0
    %204 = vmatpush1.msra.mxu0 0.0
    %205 = vmatprep.mubr.f32.mxu0 0.0
    %206 = vmatmul.mubr.f32.gmra.mrb[0].mxu0 %v139
    %v207 = vpop.f32.mrb[0].mxu0
    %v208 = vadd.f32 %v136, %v207
    %v209 = vpop.f32.mrb[0].mxu0
    %210 = vdwg.mxu0
    %v211 = vtanh.pop %v208
    %s212 = scalar_lea.vmem %s3, 32
    %v213 = vld [vmem:[%s212] sm:$0xff]
    %v214 = vld [vmem:[%s212 + $0x8] sm:$0xff]
    %v215 = vld [vmem:[%s212 + $0x10] sm:$0xff]
    %v216 = vld [vmem:[%s212 + $0x18] sm:$0xff]
    %v217 = vld [vmem:[%s4 + $0x1] sm:$0x1]
    %v218 = vlaneseq
    %v219 = vshrl.u32 %v218, 7
    %v220 = vsub.s32 0, %v219
    %v221 = vrot.slane %v217, %v220
    %v223 = vsel %vm137, %v211, 0
    %225 = vmatprep.subr.mxu0 0.0
    %226 = vmatpush1.msra.mxu0 %v213
    %227 = vmatprep.subr.mxu0 0.0
    %228 = vmatpush1.msra.mxu0 %v214
    %229 = vmatprep.subr.mxu0 0.0
    %230 = vmatpush1.msra.mxu0 %v215
    %231 = vmatprep.subr.mxu0 0.0
    %232 = vmatpush1.msra.mxu0 %v216
    %233 = vmatprep.subr.mxu0 0.0
    %234 = vmatpush1.msra.mxu0 0.0
    %235 = vmatprep.subr.mxu0 0.0
    %236 = vmatpush1.msra.mxu0 0.0
    %237 = vmatprep.subr.mxu0 0.0
    %238 = vmatpush1.msra.mxu0 0.0
    %239 = vmatprep.subr.mxu0 0.0
    %240 = vmatpush1.msra.mxu0 0.0
    %241 = vmatprep.subr.mxu0 0.0
    %242 = vmatpush1.msra.mxu0 0.0
    %243 = vmatprep.subr.mxu0 0.0
    %244 = vmatpush1.msra.mxu0 0.0
    %245 = vmatprep.subr.mxu0 0.0
    %246 = vmatpush1.msra.mxu0 0.0
    %247 = vmatprep.subr.mxu0 0.0
    %248 = vmatpush1.msra.mxu0 0.0
    %249 = vmatprep.subr.mxu0 0.0
    %250 = vmatpush1.msra.mxu0 0.0
    %251 = vmatprep.subr.mxu0 0.0
    %252 = vmatpush1.msra.mxu0 0.0
    %253 = vmatprep.subr.mxu0 0.0
    %254 = vmatpush1.msra.mxu0 0.0
    %255 = vmatprep.subr.mxu0 0.0
    %256 = vmatpush1.msra.mxu0 0.0
    %257 = vmatprep.subr.mxu0 0.0
    %258 = vmatpush1.msra.mxu0 0.0
    %259 = vmatprep.subr.mxu0 0.0
    %260 = vmatpush1.msra.mxu0 0.0
    %261 = vmatprep.subr.mxu0 0.0
    %262 = vmatpush1.msra.mxu0 0.0
    %263 = vmatprep.subr.mxu0 0.0
    %264 = vmatpush1.msra.mxu0 0.0
    %265 = vmatprep.subr.mxu0 0.0
    %266 = vmatpush1.msra.mxu0 0.0
    %267 = vmatprep.subr.mxu0 0.0
    %268 = vmatpush1.msra.mxu0 0.0
    %269 = vmatprep.subr.mxu0 0.0
    %270 = vmatpush1.msra.mxu0 0.0
    %271 = vmatprep.subr.mxu0 0.0
    %272 = vmatpush1.msra.mxu0 0.0
    %273 = vmatprep.subr.mxu0 0.0
    %274 = vmatpush1.msra.mxu0 0.0
    %275 = vmatprep.subr.mxu0 0.0
    %276 = vmatpush1.msra.mxu0 0.0
    %277 = vmatprep.subr.mxu0 0.0
    %278 = vmatpush1.msra.mxu0 0.0
    %279 = vmatprep.subr.mxu0 0.0
    %280 = vmatpush1.msra.mxu0 0.0
    %281 = vmatprep.subr.mxu0 0.0
    %282 = vmatpush1.msra.mxu0 0.0
    %283 = vmatprep.subr.mxu0 0.0
    %284 = vmatpush1.msra.mxu0 0.0
    %285 = vmatprep.subr.mxu0 0.0
    %286 = vmatpush1.msra.mxu0 0.0
    %287 = vmatprep.subr.mxu0 0.0
    %288 = vmatpush1.msra.mxu0 0.0
    %289 = vmatprep.mubr.f32.mxu0 0.0
    %290 = vmatmul.mubr.f32.gmra.mrb[0].mxu0 %v223
    %v291 = vpop.f32.mrb[0].mxu0
    %v292 = vadd.f32 %v221, %v291
    %v293 = vpop.f32.mrb[0].mxu0
    %294 = vdwg.mxu0
    %v295 = vtanh.pop %v292
    %v296 = vld [vmem:[#allocation2] sm:$0xff]
    %v297 = vld [vmem:[#allocation2 + $0x8] sm:$0xff]
    %v298 = vld [vmem:[#allocation2 + $0x10] sm:$0xff]
    %v299 = vld [vmem:[#allocation2 + $0x18] sm:$0xff]
    %v300 = vld [vmem:[%s6] sm:$0x1]
    %v302 = vlaneseq
    %v303 = vshrl.u32 %v302, 7
    %v304 = vsub.s32 0, %v303
    %v305 = vrot.slane %v300, %v304
    %v308 = vsel %vm137, %v295, 0
    %310 = vmatprep.subr.mxu0 0.0
    %311 = vmatpush1.msra.mxu0 %v296
    %312 = vmatprep.subr.mxu0 0.0
    %313 = vmatpush1.msra.mxu0 %v297
    %314 = vmatprep.subr.mxu0 0.0
    %315 = vmatpush1.msra.mxu0 %v298
    %316 = vmatprep.subr.mxu0 0.0
    %317 = vmatpush1.msra.mxu0 %v299
    %318 = vmatprep.subr.mxu0 0.0
    %319 = vmatpush1.msra.mxu0 0.0
    %320 = vmatprep.subr.mxu0 0.0
    %321 = vmatpush1.msra.mxu0 0.0
    %322 = vmatprep.subr.mxu0 0.0
    %323 = vmatpush1.msra.mxu0 0.0
    %324 = vmatprep.subr.mxu0 0.0
    %325 = vmatpush1.msra.mxu0 0.0
    %326 = vmatprep.subr.mxu0 0.0
    %327 = vmatpush1.msra.mxu0 0.0
    %328 = vmatprep.subr.mxu0 0.0
    %329 = vmatpush1.msra.mxu0 0.0
    %330 = vmatprep.subr.mxu0 0.0
    %331 = vmatpush1.msra.mxu0 0.0
    %332 = vmatprep.subr.mxu0 0.0
    %333 = vmatpush1.msra.mxu0 0.0
    %334 = vmatprep.subr.mxu0 0.0
    %335 = vmatpush1.msra.mxu0 0.0
    %336 = vmatprep.subr.mxu0 0.0
    %337 = vmatpush1.msra.mxu0 0.0
    %338 = vmatprep.subr.mxu0 0.0
    %339 = vmatpush1.msra.mxu0 0.0
    %340 = vmatprep.subr.mxu0 0.0
    %341 = vmatpush1.msra.mxu0 0.0
    %342 = vmatprep.subr.mxu0 0.0
    %343 = vmatpush1.msra.mxu0 0.0
    %344 = vmatprep.subr.mxu0 0.0
    %345 = vmatpush1.msra.mxu0 0.0
    %346 = vmatprep.subr.mxu0 0.0
    %347 = vmatpush1.msra.mxu0 0.0
    %348 = vmatprep.subr.mxu0 0.0
    %349 = vmatpush1.msra.mxu0 0.0
    %350 = vmatprep.subr.mxu0 0.0
    %351 = vmatpush1.msra.mxu0 0.0
    %352 = vmatprep.subr.mxu0 0.0
    %353 = vmatpush1.msra.mxu0 0.0
    %354 = vmatprep.subr.mxu0 0.0
    %355 = vmatpush1.msra.mxu0 0.0
    %356 = vmatprep.subr.mxu0 0.0
    %357 = vmatpush1.msra.mxu0 0.0
    %358 = vmatprep.subr.mxu0 0.0
    %359 = vmatpush1.msra.mxu0 0.0
    %360 = vmatprep.subr.mxu0 0.0
    %361 = vmatpush1.msra.mxu0 0.0
    %362 = vmatprep.subr.mxu0 0.0
    %363 = vmatpush1.msra.mxu0 0.0
    %364 = vmatprep.subr.mxu0 0.0
    %365 = vmatpush1.msra.mxu0 0.0
    %366 = vmatprep.subr.mxu0 0.0
    %367 = vmatpush1.msra.mxu0 0.0
    %368 = vmatprep.subr.mxu0 0.0
    %369 = vmatpush1.msra.mxu0 0.0
    %370 = vmatprep.subr.mxu0 0.0
    %371 = vmatpush1.msra.mxu0 0.0
    %372 = vmatprep.subr.mxu0 0.0
    %373 = vmatpush1.msra.mxu0 0.0
    %374 = vmatprep.mubr.f32.mxu0 0.0
    %375 = vmatmul.mubr.f32.gmra.mrb[0].mxu0 %v308
    %v376 = vpop.f32.mrb[0].mxu0
    %v377 = vadd.f32 %v305, %v376
    %v378 = vpop.f32.mrb[0].mxu0
    %379 = vdwg.mxu0
    %vm380 = vcmask 293888
    %381 = vst.msk [vmem:[%s7] sm:$0xff] %vm380, %v377
    // Predicated region
    $region34: #{model_forward.1} parent=1 // pred_check
      _
    $region35: #{model_forward.1} parent=1 // pred_check_branch
      %383 = sbr.rel (0) target = $region37
    $region36: #{model_forward.1} parent=1 // pred_region
      _
    $region37: #{model_forward.1} parent=1 // pred_fallthru
      _
    // Predicated region
    $region38: #{model_forward.1} parent=1 // pred_check
      _
    $region39: #{model_forward.1} parent=1 // pred_check_branch
      %385 = sbr.rel (0) target = $region41
    $region40: #{model_forward.1} parent=1 // pred_region
      _
    $region41: #{model_forward.1} parent=1 // pred_fallthru
      _
    %386 = vsyncpa [#allocation3], 1

</llo_original>
